<compile_context>
chip_gen: v5e
topology: v5e:2x2
jax: 0.10.0
libtpu: 0.0.40
codegen_flags: <defaults>
</compile_context>

<pallas_src>
import jax
import jax.numpy as jnp
import numpy as np
from jax.experimental import pallas as pl
from jax.experimental.pallas import tpu as pltpu


def iresblock_kernel(xT_ref, w1t_ref, b1t_ref, w2t_ref, b2t_ref, mask_ref,
                     yT_ref):
    """One batch tile: yT = xT - mask * (W2^T @ tanh(W1^T @ xT + b1) + b2).

    Shapes (per tile):
      xT_ref   (D, B_TILE)   batch on lanes  -> lane-dense loads/stores
      w1t_ref  (H, D)        resident
      b1t_ref  (H, 1)        resident
      w2t_ref  (D, H)        resident
      b2t_ref  (D, 1)        resident
      mask_ref (D, 1)        diag(U) as a column vector, resident
      yT_ref   (D, B_TILE)
    """
    xT = xT_ref[...]                                                  # (D, Bt)
    hT = jnp.tanh(
        jnp.dot(w1t_ref[...], xT, preferred_element_type=jnp.float32)  # (H, Bt)
        + b1t_ref[...]
    )
    fT = (
        jnp.dot(w2t_ref[...], hT, preferred_element_type=jnp.float32)  # (D, Bt)
        + b2t_ref[...]
    )
    # f(x) @ U with diagonal U == per-node mask multiply (VPU, no 3rd matmul).
    yT_ref[...] = (xT - mask_ref[...] * fT).astype(yT_ref.dtype)


def iresblock_forward(x, w1, b1, w2, b2, mask, *, b_tile=128):
    """y = x - f(x) @ diag(mask), with f(x) = tanh(x@W1 + b1) @ W2 + b2.

    x: (B, D); w1: (D, H); b1: (H,); w2: (H, D); b2: (D,); mask: (D,) 0/1.
    """
    B, D = x.shape
    H = w1.shape[1]

    # Transposed, lane-dense layout: batch on the lane (last) axis.
    xT = x.T                                        # (D, B)
    n_tiles = pl.cdiv(B, b_tile)
    Bp = n_tiles * b_tile
    if Bp != B:                                     # pad batch to tile multiple
        xT = jnp.pad(xT, ((0, 0), (0, Bp - B)))

    w1t = jnp.asarray(w1).T                         # (H, D)
    w2t = jnp.asarray(w2).T                         # (D, H)
    b1c = jnp.asarray(b1).reshape(H, 1)
    b2c = jnp.asarray(b2).reshape(D, 1)
    maskc = jnp.asarray(mask, dtype=x.dtype).reshape(D, 1)

    yT = pl.pallas_call(
        iresblock_kernel,
        out_shape=jax.ShapeDtypeStruct((D, Bp), x.dtype),
        grid_spec=pltpu.PrefetchScalarGridSpec(
            num_scalar_prefetch=0,
            grid=(n_tiles,),
            in_specs=[
                # x tile streams along the batch axis (double-buffered DMA).
                pl.BlockSpec((D, b_tile), lambda i: (0, i)),
                # Weights / biases / mask stay resident across all tiles.
                pl.BlockSpec((H, D), lambda i: (0, 0)),
                pl.BlockSpec((H, 1), lambda i: (0, 0)),
                pl.BlockSpec((D, H), lambda i: (0, 0)),
                pl.BlockSpec((D, 1), lambda i: (0, 0)),
                pl.BlockSpec((D, 1), lambda i: (0, 0)),
            ],
            out_specs=pl.BlockSpec((D, b_tile), lambda i: (0, i)),
        ),
        compiler_params=pltpu.CompilerParams(
            # Batch tiles are independent -> megacore / v7x 2-TC sharding.
            dimension_semantics=("parallel",),
        ),
    )(xT, w1t, b1c, w2t, b2c, maskc)

    return yT[:, :B].T                              # back to (B, D)


def make_params(key, n_nodes, hidden):
    """Deterministic PyTorch-Linear-style init (uniform +/- 1/sqrt(fan_in))."""
    k1, k2, k3, k4 = jax.random.split(key, 4)
    lim1 = 1.0 / np.sqrt(n_nodes)
    lim2 = 1.0 / np.sqrt(hidden)
    w1 = jax.random.uniform(k1, (n_nodes, hidden), jnp.float32, -lim1, lim1)
    b1 = jax.random.uniform(k2, (hidden,), jnp.float32, -lim1, lim1)
    w2 = jax.random.uniform(k3, (hidden, n_nodes), jnp.float32, -lim2, lim2)
    b2 = jax.random.uniform(k4, (n_nodes,), jnp.float32, -lim2, lim2)
    return w1, b1, w2, b2


def build_mask(n_nodes, intervention_set):
    """diag(U): 1 for observed nodes, 0 for intervened nodes."""
    observed = np.setdiff1d(np.arange(n_nodes), np.asarray(intervention_set))
    m = np.zeros((n_nodes,), dtype=np.float32)
    m[observed] = 1.0
    return jnp.asarray(m)


def reference_forward(x, w1, b1, w2, b2, mask):
    """Pure-JAX reference using the original dense-U formulation."""
    D = x.shape[1]
    U = jnp.diag(mask).astype(x.dtype).reshape(D, D)
    f_x = jnp.tanh(x @ w1 + b1) @ w2 + b2
    return x - f_x @ U


if __name__ == "__main__":
    B, D, H = 300, 8, 32         # batch (non-multiple of tile, exercises pad),
    intervention_set = [1, 3]    # n_nodes, hidden width of f; intervened nodes

    key = jax.random.PRNGKey(0)
    kx, kp = jax.random.split(key)
    x = jax.random.normal(kx, (B, D), dtype=jnp.float32)
    w1, b1, w2, b2 = make_params(kp, D, H)
    mask = build_mask(D, intervention_set)

    y = iresblock_forward(x, w1, b1, w2, b2, mask, b_tile=128)
    y = jax.block_until_ready(y)

    y_ref = reference_forward(x, w1, b1, w2, b2, mask)
    np.testing.assert_allclose(np.asarray(y), np.asarray(y_ref),
                               rtol=1e-5, atol=1e-5)
    print("KERNEL_OK")
</pallas_src>

<mosaic_0001>
module attributes {stable_mosaic.version = 11 : i64} {
  func.func @iresblock_kernel(%arg0: i32, %arg1: memref<8x128xf32, #tpu.memory_space<vmem>>, %arg2: memref<32x8xf32, #tpu.memory_space<vmem>>, %arg3: memref<32x1xf32, #tpu.memory_space<vmem>>, %arg4: memref<8x32xf32, #tpu.memory_space<vmem>>, %arg5: memref<8x1xf32, #tpu.memory_space<vmem>>, %arg6: memref<8x1xf32, #tpu.memory_space<vmem>>, %arg7: memref<8x128xf32, #tpu.memory_space<vmem>>) attributes {dimension_semantics = [#tpu.dimension_semantics<parallel>], iteration_bounds = array<i64: 3>, scalar_prefetch = 0 : i64, scratch_operands = 0 : i64, tpu.core_type = #tpu.core_type<tc>, window_params = [{transform_indices = @transform_0, window_bounds = array<i64: 8, 128>}, {pipeline_mode = #tpu.pipeline_mode<synchronous>, transform_indices = @transform_1, window_bounds = array<i64: 32, 8>}, {pipeline_mode = #tpu.pipeline_mode<synchronous>, transform_indices = @transform_2, window_bounds = array<i64: 32, 1>}, {pipeline_mode = #tpu.pipeline_mode<synchronous>, transform_indices = @transform_3, window_bounds = array<i64: 8, 32>}, {pipeline_mode = #tpu.pipeline_mode<synchronous>, transform_indices = @transform_4, window_bounds = array<i64: 8, 1>}, {pipeline_mode = #tpu.pipeline_mode<synchronous>, transform_indices = @transform_5, window_bounds = array<i64: 8, 1>}, {transform_indices = @transform_6, window_bounds = array<i64: 8, 128>}]} {
    %c0 = arith.constant 0 : index
    %c0_0 = arith.constant 0 : index
    %0 = vector.load %arg1[%c0, %c0_0] : memref<8x128xf32, #tpu.memory_space<vmem>>, vector<8x128xf32>
    %c0_1 = arith.constant 0 : index
    %c0_2 = arith.constant 0 : index
    %1 = vector.load %arg2[%c0_1, %c0_2] : memref<32x8xf32, #tpu.memory_space<vmem>>, vector<32x8xf32>
    %cst = arith.constant dense<0.000000e+00> : vector<32x128xf32>
    %2 = tpu.matmul %1, %0, %cst {dimension_numbers = #tpu.dot_dimension_numbers<[1], [0], [0], [1], [0, 0, 1, 1], [], []>} : vector<32x8xf32>, vector<8x128xf32>, vector<32x128xf32> -> vector<32x128xf32>
    %c0_3 = arith.constant 0 : index
    %c0_4 = arith.constant 0 : index
    %3 = vector.load %arg3[%c0_3, %c0_4] : memref<32x1xf32, #tpu.memory_space<vmem>>, vector<32x1xf32>
    %4 = vector.broadcast %3 : vector<32x1xf32> to vector<32x128xf32>
    %5 = arith.addf %2, %4 : vector<32x128xf32>
    %6 = math.tanh %5 : vector<32x128xf32>
    %c0_5 = arith.constant 0 : index
    %c0_6 = arith.constant 0 : index
    %7 = vector.load %arg4[%c0_5, %c0_6] : memref<8x32xf32, #tpu.memory_space<vmem>>, vector<8x32xf32>
    %cst_7 = arith.constant dense<0.000000e+00> : vector<8x128xf32>
    %8 = tpu.matmul %7, %6, %cst_7 {dimension_numbers = #tpu.dot_dimension_numbers<[1], [0], [0], [1], [0, 0, 1, 1], [], []>} : vector<8x32xf32>, vector<32x128xf32>, vector<8x128xf32> -> vector<8x128xf32>
    %c0_8 = arith.constant 0 : index
    %c0_9 = arith.constant 0 : index
    %9 = vector.load %arg5[%c0_8, %c0_9] : memref<8x1xf32, #tpu.memory_space<vmem>>, vector<8x1xf32>
    %10 = vector.broadcast %9 : vector<8x1xf32> to vector<8x128xf32>
    %11 = arith.addf %8, %10 : vector<8x128xf32>
    %c0_10 = arith.constant 0 : index
    %c0_11 = arith.constant 0 : index
    %12 = vector.load %arg6[%c0_10, %c0_11] : memref<8x1xf32, #tpu.memory_space<vmem>>, vector<8x1xf32>
    %13 = vector.broadcast %12 : vector<8x1xf32> to vector<8x128xf32>
    %14 = arith.mulf %13, %11 : vector<8x128xf32>
    %15 = arith.subf %0, %14 : vector<8x128xf32>
    %c0_12 = arith.constant 0 : index
    %c0_13 = arith.constant 0 : index
    %16 = vector.load %arg7[%c0_12, %c0_13] : memref<8x128xf32, #tpu.memory_space<vmem>>, vector<8x128xf32>
    tpu.vector_store %arg7[%c0_12, %c0_13], %15 {strides = array<i32>} : memref<8x128xf32, #tpu.memory_space<vmem>>, vector<8x128xf32>,
    return
  }
  func.func @transform_0(%arg0: i32) -> (i32, i32) {
    %c0_i32 = arith.constant 0 : i32
    %c0_i32_0 = arith.constant 0 : i32
    return %c0_i32, %arg0 : i32, i32
  }
  func.func @transform_1(%arg0: i32) -> (i32, i32) {
    %c0_i32 = arith.constant 0 : i32
    %c0_i32_0 = arith.constant 0 : i32
    %c0_i32_1 = arith.constant 0 : i32
    return %c0_i32, %c0_i32_0 : i32, i32
  }
  func.func @transform_2(%arg0: i32) -> (i32, i32) {
    %c0_i32 = arith.constant 0 : i32
    %c0_i32_0 = arith.constant 0 : i32
    %c0_i32_1 = arith.constant 0 : i32
    return %c0_i32, %c0_i32_0 : i32, i32
  }
  func.func @transform_3(%arg0: i32) -> (i32, i32) {
    %c0_i32 = arith.constant 0 : i32
    %c0_i32_0 = arith.constant 0 : i32
    %c0_i32_1 = arith.constant 0 : i32
    return %c0_i32, %c0_i32_0 : i32, i32
  }
  func.func @transform_4(%arg0: i32) -> (i32, i32) {
    %c0_i32 = arith.constant 0 : i32
    %c0_i32_0 = arith.constant 0 : i32
    %c0_i32_1 = arith.constant 0 : i32
    return %c0_i32, %c0_i32_0 : i32, i32
  }
  func.func @transform_5(%arg0: i32) -> (i32, i32) {
    %c0_i32 = arith.constant 0 : i32
    %c0_i32_0 = arith.constant 0 : i32
    %c0_i32_1 = arith.constant 0 : i32
    return %c0_i32, %c0_i32_0 : i32, i32
  }
  func.func @transform_6(%arg0: i32) -> (i32, i32) {
    %c0_i32 = arith.constant 0 : i32
    %c0_i32_0 = arith.constant 0 : i32
    return %c0_i32, %arg0 : i32, i32
  }
}

</mosaic_0001>

<llo_original>
// kernel: tpu_custom_call.1
$region0: #{tpu_custom_call.1}
  #allocation0 [shape = 'u32[]', space=smem, size = 0x4, offset = 0x4, fixed_abs, tag = 'smem constant byte address 0x4 - core index']
  #allocation1 [shape = 'u32[72,128]{1,0:T(1,128)}', space=vmem, size = 0x9000, scoped, tag = 'internal scratch']
  %s0 = inlined_call_operand.vmem [shape: f32[8,384], index: 0, kind: input, shape index: {}]
  %s1 = inlined_call_operand.vmem [shape: f32[32,8], index: 1, kind: input, shape index: {}]
  %s2 = inlined_call_operand.vmem [shape: f32[32,1], index: 2, kind: input, shape index: {}]
  %s3 = inlined_call_operand.vmem [shape: f32[8,32], index: 3, kind: input, shape index: {}]
  %s4 = inlined_call_operand.vmem [shape: f32[8,1], index: 4, kind: input, shape index: {}]
  %s5 = inlined_call_operand.vmem [shape: f32[8,1], index: 5, kind: input, shape index: {}]
  %s6 = inlined_call_operand.hbm [shape: f32[8,384], index: 6, kind: output, shape index: {}]
  %s7 = sld [smem:[#allocation0]]
  $region57: #{tpu_custom_call.1} parent=0
    _
  %s9 = ssub.s32 1, %s7
  %s10 = scalar_select 0, %s9, %s7
  $region1: #{tpu_custom_call.1} parent=0
    #allocation2 [shape = 'u8[8192]{0}', space=vmem, size = 0x2000, scoped, tag = 'output window, operand 0']
    #allocation3 [shape = 's32[2]{0}', space=sflag, size = 0x8, scoped, tag = 'scoped memory for tpu_custom_call.1']
    %11 = vsyncpa [#allocation3], 0
    %s12 = scalar_lea.sflag [#allocation3], 1
    %13 = vsyncpa %s12, 0
    loop: start=0, step=1, limit=5
    $region2: #{tpu_custom_call.1} parent=1 // loop_pre_header
      _
    $region3: #{tpu_custom_call.1} parent=1 // loop_header
      %s15 = sphi 0, %s19
      %p16 = scmp.ge.s32.totalorder %s15, 5
      %s25 = sphi 0, %s27
      %s28 = sphi 0, %s25
      %s29 = sphi 0, %s28
      %s45 = sphi 0, %s29
      %s49 = sphi 0, %s49
      %s51 = sphi 0, %s49
      %s52 = sphi 0, %s51
      %s66 = sphi 0, %s52
      %s70 = sphi 0, %s70
      %s72 = sphi 0, %s70
      %s73 = sphi 0, %s72
      %s87 = sphi 0, %s73
      %s91 = sphi 0, %s91
      %s93 = sphi 0, %s91
      %s94 = sphi 0, %s93
      %s108 = sphi 0, %s94
      %s112 = sphi 0, %s112
      %s114 = sphi 0, %s112
      %s115 = sphi 0, %s114
      %s129 = sphi 0, %s115
      %s133 = sphi 0, %s133
      %s135 = sphi 0, %s133
      %s136 = sphi 0, %s135
      %s150 = sphi 0, %s136
      %s156 = sphi 0, %s158
      %s159 = sphi 0, %s156
      %s160 = sphi 0, %s159
      %s176 = sphi 0, %s160
    $region4: #{tpu_custom_call.1} parent=1 // loop_header_branch
      %18 = sbr.rel (%p16) target = $region8
    $region5: #{tpu_custom_call.1} parent=1 // loop_body
      %s20 = ssub.s32 %s15, 1
      %s21 = ssub.s32 %s15, 2
      %s22 = sadd.s32 %s15, 1
      %s23 = ssub.s32 %s15, %s22
      %p24 = scmp.eq.s32.totalorder %s23, 0
      %s26 = sadd.s32 %s25, 1
      %s27 = scalar_select %p24, %s25, %s26
      %p30 = pneg %p24
      %p31 = scmp.eq.s32.totalorder %s15, 2
      %p32 = por %p30, %p31
      %p33 = scmp.ne.s32.totalorder %s25, %s28
      %p34 = scmp.eq.s32.totalorder %s15, 0
      %p35 = por %p33, %p34
      %p36 = scmp.ne.s32.totalorder %s25, %s28
      %p37 = scmp.eq.s32.totalorder %s20, 2
      %p38 = por %p36, %p37
      %p39 = scmp.ne.s32.totalorder %s28, %s29
      %p40 = scmp.eq.s32.totalorder %s20, 0
      %p41 = por %p39, %p40
      %p42 = scmp.ne.s32.totalorder %s28, %s29
      %p43 = scmp.eq.s32.totalorder %s21, 2
      %p44 = por %p42, %p43
      %p46 = scmp.ne.s32.totalorder %s29, %s45
      %p47 = scmp.eq.s32.totalorder %s21, 0
      %p48 = por %p46, %p47
      %s50 = sadd.s32 %s49, 1
      %p53 = scmp.eq.s32.totalorder %s15, 2
      %p54 = scmp.ne.s32.totalorder %s49, %s51
      %p55 = scmp.eq.s32.totalorder %s15, 0
      %p56 = por %p54, %p55
      %p57 = scmp.ne.s32.totalorder %s49, %s51
      %p58 = scmp.eq.s32.totalorder %s20, 2
      %p59 = por %p57, %p58
      %p60 = scmp.ne.s32.totalorder %s51, %s52
      %p61 = scmp.eq.s32.totalorder %s20, 0
      %p62 = por %p60, %p61
      %p63 = scmp.ne.s32.totalorder %s51, %s52
      %p64 = scmp.eq.s32.totalorder %s21, 2
      %p65 = por %p63, %p64
      %p67 = scmp.ne.s32.totalorder %s52, %s66
      %p68 = scmp.eq.s32.totalorder %s21, 0
      %p69 = por %p67, %p68
      %s71 = sadd.s32 %s70, 1
      %p74 = scmp.eq.s32.totalorder %s15, 2
      %p75 = scmp.ne.s32.totalorder %s70, %s72
      %p76 = scmp.eq.s32.totalorder %s15, 0
      %p77 = por %p75, %p76
      %p78 = scmp.ne.s32.totalorder %s70, %s72
      %p79 = scmp.eq.s32.totalorder %s20, 2
      %p80 = por %p78, %p79
      %p81 = scmp.ne.s32.totalorder %s72, %s73
      %p82 = scmp.eq.s32.totalorder %s20, 0
      %p83 = por %p81, %p82
      %p84 = scmp.ne.s32.totalorder %s72, %s73
      %p85 = scmp.eq.s32.totalorder %s21, 2
      %p86 = por %p84, %p85
      %p88 = scmp.ne.s32.totalorder %s73, %s87
      %p89 = scmp.eq.s32.totalorder %s21, 0
      %p90 = por %p88, %p89
      %s92 = sadd.s32 %s91, 1
      %p95 = scmp.eq.s32.totalorder %s15, 2
      %p96 = scmp.ne.s32.totalorder %s91, %s93
      %p97 = scmp.eq.s32.totalorder %s15, 0
      %p98 = por %p96, %p97
      %p99 = scmp.ne.s32.totalorder %s91, %s93
      %p100 = scmp.eq.s32.totalorder %s20, 2
      %p101 = por %p99, %p100
      %p102 = scmp.ne.s32.totalorder %s93, %s94
      %p103 = scmp.eq.s32.totalorder %s20, 0
      %p104 = por %p102, %p103
      %p105 = scmp.ne.s32.totalorder %s93, %s94
      %p106 = scmp.eq.s32.totalorder %s21, 2
      %p107 = por %p105, %p106
      %p109 = scmp.ne.s32.totalorder %s94, %s108
      %p110 = scmp.eq.s32.totalorder %s21, 0
      %p111 = por %p109, %p110
      %s113 = sadd.s32 %s112, 1
      %p116 = scmp.eq.s32.totalorder %s15, 2
      %p117 = scmp.ne.s32.totalorder %s112, %s114
      %p118 = scmp.eq.s32.totalorder %s15, 0
      %p119 = por %p117, %p118
      %p120 = scmp.ne.s32.totalorder %s112, %s114
      %p121 = scmp.eq.s32.totalorder %s20, 2
      %p122 = por %p120, %p121
      %p123 = scmp.ne.s32.totalorder %s114, %s115
      %p124 = scmp.eq.s32.totalorder %s20, 0
      %p125 = por %p123, %p124
      %p126 = scmp.ne.s32.totalorder %s114, %s115
      %p127 = scmp.eq.s32.totalorder %s21, 2
      %p128 = por %p126, %p127
      %p130 = scmp.ne.s32.totalorder %s115, %s129
      %p131 = scmp.eq.s32.totalorder %s21, 0
      %p132 = por %p130, %p131
      %s134 = sadd.s32 %s133, 1
      %p137 = scmp.eq.s32.totalorder %s15, 2
      %p138 = scmp.ne.s32.totalorder %s133, %s135
      %p139 = scmp.eq.s32.totalorder %s15, 0
      %p140 = por %p138, %p139
      %p141 = scmp.ne.s32.totalorder %s133, %s135
      %p142 = scmp.eq.s32.totalorder %s20, 2
      %p143 = por %p141, %p142
      %p144 = scmp.ne.s32.totalorder %s135, %s136
      %p145 = scmp.eq.s32.totalorder %s20, 0
      %p146 = por %p144, %p145
      %p147 = scmp.ne.s32.totalorder %s135, %s136
      %p148 = scmp.eq.s32.totalorder %s21, 2
      %p149 = por %p147, %p148
      %p151 = scmp.ne.s32.totalorder %s136, %s150
      %p152 = scmp.eq.s32.totalorder %s21, 0
      %p153 = por %p151, %p152
      %s154 = ssub.s32 %s15, %s22
      %p155 = scmp.eq.s32.totalorder %s154, 0
      %s157 = sadd.s32 %s156, 1
      %s158 = scalar_select %p155, %s156, %s157
      %p161 = pneg %p155
      %p162 = scmp.eq.s32.totalorder %s15, 2
      %p163 = por %p161, %p162
      %p164 = scmp.ne.s32.totalorder %s156, %s159
      %p165 = scmp.eq.s32.totalorder %s15, 0
      %p166 = por %p164, %p165
      %p167 = scmp.ne.s32.totalorder %s156, %s159
      %p168 = scmp.eq.s32.totalorder %s20, 2
      %p169 = por %p167, %p168
      %p170 = scmp.ne.s32.totalorder %s159, %s160
      %p171 = scmp.eq.s32.totalorder %s20, 0
      %p172 = por %p170, %p171
      %p173 = scmp.ne.s32.totalorder %s159, %s160
      %p174 = scmp.eq.s32.totalorder %s21, 2
      %p175 = por %p173, %p174
      %p177 = scmp.ne.s32.totalorder %s160, %s176
      %p178 = scmp.eq.s32.totalorder %s21, 0
      %p179 = por %p177, %p178
      %p180 = scmp.le.s32.totalorder 1, %s15
      %p181 = scmp.lt.s32.totalorder %s15, 4
      %p182 = pnand %p180, %p181
      %p183 = pneg %p182
      // Predicated region
      $region9: #{tpu_custom_call.1} parent=5 // pred_check
        _
      $region10: #{tpu_custom_call.1} parent=5 // pred_check_branch
        %185 = sbr.rel (%p182) target = $region12
      $region11: #{tpu_custom_call.1} parent=5 // pred_region
        %s186 = ssub.s32 %s15, 1
        // Predicated region
        $region13: #{tpu_custom_call.1} parent=11 // pred_check
          %p187 = pneg %p62
        $region14: #{tpu_custom_call.1} parent=11 // pred_check_branch
          %189 = sbr.rel (%p187) target = $region16
        $region15: #{tpu_custom_call.1} parent=11 // pred_region
          _
        $region16: #{tpu_custom_call.1} parent=11 // pred_fallthru
          _
        // Predicated region
        $region17: #{tpu_custom_call.1} parent=11 // pred_check
          %p190 = pneg %p83
        $region18: #{tpu_custom_call.1} parent=11 // pred_check_branch
          %192 = sbr.rel (%p190) target = $region20
        $region19: #{tpu_custom_call.1} parent=11 // pred_region
          _
        $region20: #{tpu_custom_call.1} parent=11 // pred_fallthru
          _
        // Predicated region
        $region21: #{tpu_custom_call.1} parent=11 // pred_check
          %p193 = pneg %p104
        $region22: #{tpu_custom_call.1} parent=11 // pred_check_branch
          %195 = sbr.rel (%p193) target = $region24
        $region23: #{tpu_custom_call.1} parent=11 // pred_region
          _
        $region24: #{tpu_custom_call.1} parent=11 // pred_fallthru
          _
        // Predicated region
        $region25: #{tpu_custom_call.1} parent=11 // pred_check
          %p196 = pneg %p125
        $region26: #{tpu_custom_call.1} parent=11 // pred_check_branch
          %198 = sbr.rel (%p196) target = $region28
        $region27: #{tpu_custom_call.1} parent=11 // pred_region
          _
        $region28: #{tpu_custom_call.1} parent=11 // pred_fallthru
          _
        // Predicated region
        $region29: #{tpu_custom_call.1} parent=11 // pred_check
          %p199 = pneg %p146
        $region30: #{tpu_custom_call.1} parent=11 // pred_check_branch
          %201 = sbr.rel (%p199) target = $region32
        $region31: #{tpu_custom_call.1} parent=11 // pred_region
          _
        $region32: #{tpu_custom_call.1} parent=11 // pred_fallthru
          _
      $region12: #{tpu_custom_call.1} parent=5 // pred_fallthru
        _
      %p202 = scmp.lt.s32.totalorder %s15, 3
      // Predicated region
      $region33: #{tpu_custom_call.1} parent=5 // pred_check
        %p203 = pneg %p202
      $region34: #{tpu_custom_call.1} parent=5 // pred_check_branch
        %205 = sbr.rel (%p203) target = $region36
      $region35: #{tpu_custom_call.1} parent=5 // pred_region
        // Predicated region
        $region37: #{tpu_custom_call.1} parent=35 // pred_check
          %p206 = pneg %p35
        $region38: #{tpu_custom_call.1} parent=35 // pred_check_branch
          %208 = sbr.rel (%p206) target = $region40
        $region39: #{tpu_custom_call.1} parent=35 // pred_region
          %p209 = scmp.lt.s32.totalorder %s15, 2
          %s210 = scalar_select %p209, %s15, 2
          %s211 = smul.addr %s210, 8
          %s212 = scalar_lea.vmem %s0, %s211
        $region40: #{tpu_custom_call.1} parent=35 // pred_fallthru
          _
      $region36: #{tpu_custom_call.1} parent=5 // pred_fallthru
        _
      %p213 = scmp.le.s32.totalorder 1, %s15
      %p214 = scmp.lt.s32.totalorder %s15, 4
      %p215 = pnand %p213, %p214
      %p216 = pneg %p215
      // Predicated region
      $region41: #{tpu_custom_call.1} parent=5 // pred_check
        _
      $region42: #{tpu_custom_call.1} parent=5 // pred_check_branch
        %218 = sbr.rel (%p215) target = $region44
      $region43: #{tpu_custom_call.1} parent=5 // pred_region
        %s219 = ssub.s32 %s15, 1
        %p220 = scmp.lt.s32.totalorder %s20, 2
        %s221 = scalar_select %p220, %s20, 2
        %s222 = smul.addr %s221, 8
        %s223 = scalar_lea.vmem %s0, %s222
        %p224 = pneg %p41
        %p225 = pneg %p38
        %p226 = pneg %p62
        %p227 = pneg %p59
        %p228 = pneg %p83
        %p229 = pneg %p80
        %p230 = pneg %p104
        %p231 = pneg %p101
        %p232 = pneg %p125
        %p233 = pneg %p122
        %p234 = pneg %p146
        %p235 = pneg %p143
        %p236 = pneg %p172
        %p237 = pneg %p169
        %s238 = sand.u32 %s159, 1
        %s239 = scalar_lea.sflag [#allocation3], %s238
        %s240 = sand.u32 %s159, 1
        %s241 = smul.addr %s240, 8
        %s242 = scalar_lea.vmem [#allocation2], %s241
        %p243 = scmp.lt.s32.totalorder %s20, 2
        %s244 = scalar_select %p243, %s20, 2
        %s245 = smul.addr %s244, 8
        %s246 = scalar_lea.vmem %s0, %s245
        %v247 = vld [vmem:[%s246] sm:$0xff]
        %v248 = vld [vmem:[%s1] sm:$0xff]
        %v249 = vld [vmem:[%s1 + $0x8] sm:$0xff]
        %v250 = vld [vmem:[%s1 + $0x10] sm:$0xff]
        %v251 = vld [vmem:[%s1 + $0x18] sm:$0xff]
        %v252 = vld [vmem:[%s2] sm:$0xff]
        %v253 = vld [vmem:[%s2 + $0x8] sm:$0xff]
        %v254 = vld [vmem:[%s2 + $0x10] sm:$0xff]
        %v255 = vld [vmem:[%s2 + $0x18] sm:$0xff]
        %257 = vset.pattern.permute.xlu0 0
        %258 = vperm.xlu0 %257, %v252
        %v259 = vpop.permute.xlu0 %258
        %262 = vset.pattern.permute.xlu0 0
        %263 = vperm.xlu0 %262, %v253
        %v264 = vpop.permute.xlu0 %263
        %267 = vset.pattern.permute.xlu0 0
        %268 = vperm.xlu0 %267, %v254
        %v269 = vpop.permute.xlu0 %268
        %272 = vset.pattern.permute.xlu0 0
        %273 = vperm.xlu0 %272, %v255
        %v274 = vpop.permute.xlu0 %273
        %vm276 = vcmask 64512
        %v278 = vsel %vm276, %v248, 0
        %v281 = vsel %vm276, %v249, 0
        %v284 = vsel %vm276, %v250, 0
        %v287 = vsel %vm276, %v251, 0
        %289 = vmatpush.msra.mxu0 0.0
        %290 = vmatpush.msra.mxu0 0.0
        %291 = vmatpush.msra.mxu0 0.0
        %292 = vmatpush.msra.mxu0 0.0
        %293 = vmatpush.msra.mxu0 0.0
        %294 = vmatpush.msra.mxu0 0.0
        %295 = vmatpush.msra.mxu0 0.0
        %296 = vmatpush.msra.mxu0 0.0
        %297 = vmatpush.msra.mxu0 0.0
        %298 = vmatpush.msra.mxu0 0.0
        %299 = vmatpush.msra.mxu0 0.0
        %300 = vmatpush.msra.mxu0 0.0
        %301 = vmatpush.msra.mxu0 0.0
        %302 = vmatpush.msra.mxu0 0.0
        %303 = vmatpush.msra.mxu0 0.0
        %304 = vmatpush.msra.mxu0 %v247
        %305 = vmatmul.f32.gmra.mxu0 %v278
        %v306 = vpop.f32.mrf.mxu0
        %v307 = vadd.f32 %v259, %v306
        %308 = vmatmul.f32.gmra.mxu0 %v281
        %v309 = vpop.f32.mrf.mxu0
        %v310 = vadd.f32 %v264, %v309
        %311 = vmatmul.f32.gmra.mxu0 %v284
        %v312 = vpop.f32.mrf.mxu0
        %v313 = vadd.f32 %v269, %v312
        %314 = vmatmul.f32.gmra.mxu0 %v287
        %v315 = vpop.f32.mrf.mxu0
        %v316 = vadd.f32 %v274, %v315
        %317 = vdwg.mxu0
        %v318 = vtanh.pop %v307
        %v319 = vtanh.pop %v310
        %v320 = vtanh.pop %v313
        %v321 = vtanh.pop %v316
        %v322 = vld [vmem:[%s3] sm:$0xff]
        %v323 = vld [vmem:[%s4] sm:$0xff]
        %325 = vset.pattern.permute.xlu0 0
        %326 = vperm.xlu0 %325, %v323
        %v327 = vpop.permute.xlu0 %326
        %vm329 = vcmask 261120
        %v331 = vsel %vm329, %v322, 0
        %333 = vmatpush.msra.mxu0 0.0
        %334 = vmatpush.msra.mxu0 0.0
        %335 = vmatpush.msra.mxu0 0.0
        %336 = vmatpush.msra.mxu0 0.0
        %337 = vmatpush.msra.mxu0 0.0
        %338 = vmatpush.msra.mxu0 0.0
        %339 = vmatpush.msra.mxu0 0.0
        %340 = vmatpush.msra.mxu0 0.0
        %341 = vmatpush.msra.mxu0 0.0
        %342 = vmatpush.msra.mxu0 0.0
        %343 = vmatpush.msra.mxu0 0.0
        %344 = vmatpush.msra.mxu0 0.0
        %345 = vmatpush.msra.mxu0 %v321
        %346 = vmatpush.msra.mxu0 %v320
        %347 = vmatpush.msra.mxu0 %v319
        %348 = vmatpush.msra.mxu0 %v318
        %349 = vmatmul.f32.gmra.mxu0 %v331
        %v350 = vpop.f32.mrf.mxu0
        %v351 = vadd.f32 %v327, %v350
        %352 = vdwg.mxu0
        %v353 = vld [vmem:[%s5] sm:$0xff]
        %355 = vset.pattern.permute.xlu0 0
        %356 = vperm.xlu0 %355, %v353
        %v357 = vpop.permute.xlu0 %356
        %v359 = vmul.f32 %v357, %v351
        %v360 = vsub.f32 %v247, %v359
        %361 = vst [vmem:[%s242] sm:$0xff] %v360
        %s362 = sand.u32 %s159, 1
        %s363 = scalar_lea.sflag [#allocation3], %s362
        %s364 = sand.u32 %s159, 1
        %s365 = smul.addr %s364, 8
        %s366 = scalar_lea.vmem [#allocation2], %s365
        // Predicated region
        $region45: #{tpu_custom_call.1} parent=43 // pred_check
          %p367 = pneg %p169
        $region46: #{tpu_custom_call.1} parent=43 // pred_check_branch
          %369 = sbr.rel (%p367) target = $region48
        $region47: #{tpu_custom_call.1} parent=43 // pred_region
          %371 = vsyncadd %s363, 0
          %s372 = smul.addr %s20, 8
          %s373 = scalar_lea.hbm %s6, %s372
          %s375 = sshll.u32 %s366, 4
          %s376 = int_to_ptr.vmem [resolvable:$true] %s375
          %s377 = sshll.u32 %s373, 4
          %s378 = int_to_ptr.hbm [resolvable:$true] %s377
          %380 = dma.vmem_to_hbm [thread:$0]  %s376, 128, %s378, %s363
        $region48: #{tpu_custom_call.1} parent=43 // pred_fallthru
          _
      $region44: #{tpu_custom_call.1} parent=5 // pred_fallthru
        _
      %p381 = scmp.le.s32.totalorder 2, %s15
      // Predicated region
      $region49: #{tpu_custom_call.1} parent=5 // pred_check
        %p382 = pneg %p381
      $region50: #{tpu_custom_call.1} parent=5 // pred_check_branch
        %384 = sbr.rel (%p382) target = $region52
      $region51: #{tpu_custom_call.1} parent=5 // pred_region
        %s385 = ssub.s32 %s15, 2
        // Predicated region
        $region53: #{tpu_custom_call.1} parent=51 // pred_check
          %p386 = pneg %p175
        $region54: #{tpu_custom_call.1} parent=51 // pred_check_branch
          %388 = sbr.rel (%p386) target = $region56
        $region55: #{tpu_custom_call.1} parent=51 // pred_region
          %s389 = sand.u32 %s160, 1
          %s390 = scalar_lea.sflag [#allocation3], %s389
          %s391 = sand.u32 %s160, 1
          %s392 = smul.addr %s391, 8
          %s393 = scalar_lea.vmem [#allocation2], %s392
          %395 = dma.done %s390, 128
        $region56: #{tpu_custom_call.1} parent=51 // pred_fallthru
          _
      $region52: #{tpu_custom_call.1} parent=5 // pred_fallthru
        _
    $region6: #{tpu_custom_call.1} parent=1 // loop_footer
      %s19 = sadd.s32 1, %s15
    $region7: #{tpu_custom_call.1} parent=1 // loop_footer_branch
      %14 = sbr.rel target = $region3
    $region8: #{tpu_custom_call.1} parent=1 // loop_exit
      _
    %396 = vsyncpa [#allocation3], 1
    %s397 = scalar_lea.sflag [#allocation3], 1
    %398 = vsyncpa %s397, 1

</llo_original>
